<compile_context>
chip_gen: v7x
topology: tpu7x:2x2x1
jax: 0.10.0
libtpu: 0.0.40
codegen_flags: <defaults>
</compile_context>

<pallas_src>
import functools
import math

import jax
import jax.numpy as jnp
from jax import lax
from jax.experimental import pallas as pl
from jax.experimental.pallas import tpu as pltpu


def _round_up(v, m):
    return ((v + m - 1) // m) * m


def _vmem_budget_bytes():
    """Generation-aware VMEM budget (leave headroom under the physical cap)."""
    cap = 64 * 1024 * 1024  # conservative fallback (v7x-sized VMEM)
    try:
        cap = int(pltpu.get_tpu_info().vmem_capacity_bytes)
    except Exception:
        pass
    return int(cap) * 3 // 4


# -----------------------------------------------------------------------------
# Pallas GEMM kernel:
#   out[b, :, i*tm:(i+1)*tm] = sum_k W[:, k-panel] @ P[b, k-panel, i*tm:(i+1)*tm]
#                              (+ bias on the last k step)
# -----------------------------------------------------------------------------
def _gemm_kernel(w_ref, p_ref, bias_ref, o_ref, *, tk, slice_weights):
    k = pl.program_id(2)

    @pl.when(k == 0)
    def _():
        o_ref[...] = jnp.zeros_like(o_ref)

    if slice_weights:
        # Whole (O, Kp) weight matrix is resident in VMEM (constant block
        # index -> fetched once); slice the current K panel in-kernel.
        koff = pl.multiple_of(k * tk, tk)
        w_blk = w_ref[:, pl.ds(koff, tk)]
    else:
        w_blk = w_ref[...]

    # Accumulate directly into the resident f32 output block (no scratch).
    o_ref[...] += jnp.dot(w_blk, p_ref[...], preferred_element_type=jnp.float32)

    @pl.when(k == pl.num_programs(2) - 1)
    def _():
        o_ref[...] += bias_ref[...]  # fused bias; VPU has slack in a DMA-bound kernel


def _pallas_conv_gemm(w_mat, patches, bias_col, *, tm_max=4096, tk_max=512):
    """w_mat: (O, K), patches: (B, K, Ms), bias_col: (O, 1) f32 -> (B, O, Ms) f32.

    Ms (per-batch output spatial size) is the lane-dense axis ("parallel"),
    K is the reduction grid axis ("arbitrary", accumulated in the resident
    f32 output block), B is an outer "parallel" axis.
    """
    O, K = w_mat.shape
    B, K2, Ms = patches.shape
    assert K == K2
    in_bytes = jnp.dtype(patches.dtype).itemsize

    budget = _vmem_budget_bytes()

    # ---- K tiling --------------------------------------------------------
    if _round_up(K, 16) <= tk_max:
        tk = Kp = _round_up(K, 16)            # single reduction step
    else:
        tk = tk_max                           # multiple of 128 (lane-aligned slices)
        Kp = _round_up(K, tk)

    # Resident-weight path: whole (O, Kp) matrix fetched once, sliced in-kernel
    # (avoids re-streaming weights from HBM once per M tile).
    w_bytes = 2 * O * Kp * in_bytes           # conservative: double-buffered
    w_resident = w_bytes <= budget // 2
    if not w_resident:
        w_bytes = 2 * O * tk * in_bytes
    slice_weights = w_resident and (Kp > tk)

    # ---- M tiling: biggest lane-dense tile that fits the VMEM budget ------
    tm = min(_round_up(tm_max, 128), _round_up(Ms, 128))

    def _usage(tm_):
        return (w_bytes
                + 2 * tk * tm_ * in_bytes     # patches (double-buffered)
                + 2 * O * tm_ * 4             # f32 output block (double-buffered)
                + 2 * O * 4)                  # bias

    while tm > 128 and _usage(tm) > budget:
        tm -= 128
    Mp = _round_up(Ms, tm)

    if Kp != K or Mp != Ms:
        patches = jnp.pad(patches, ((0, 0), (0, Kp - K), (0, Mp - Ms)))
    if Kp != K:
        w_mat = jnp.pad(w_mat, ((0, 0), (0, Kp - K)))

    grid = (B, Mp // tm, Kp // tk)

    if w_resident:
        w_spec = pl.BlockSpec((O, Kp), lambda b, i, k: (0, 0))   # fetched once
    else:
        w_spec = pl.BlockSpec((O, tk), lambda b, i, k: (0, k))   # streamed per k step

    kernel = functools.partial(_gemm_kernel, tk=tk, slice_weights=slice_weights)

    cost = pl.CostEstimate(
        flops=2 * B * O * Kp * Mp,
        transcendentals=0,
        bytes_accessed=O * Kp * in_bytes + B * Kp * Mp * in_bytes + B * O * Mp * 4,
    )

    out = pl.pallas_call(
        kernel,
        out_shape=jax.ShapeDtypeStruct((B, O, Mp), jnp.float32),
        grid_spec=pltpu.PrefetchScalarGridSpec(
            num_scalar_prefetch=0,
            grid=grid,
            in_specs=[
                w_spec,                                                  # weights
                pl.BlockSpec((None, tk, tm), lambda b, i, k: (b, k, i)),  # patches
                pl.BlockSpec((O, 1), lambda b, i, k: (0, 0)),             # bias
            ],
            out_specs=pl.BlockSpec((None, O, tm), lambda b, i, k: (b, 0, i)),
        ),
        compiler_params=pltpu.CompilerParams(
            dimension_semantics=("parallel", "parallel", "arbitrary"),
            vmem_limit_bytes=budget,
        ),
        cost_estimate=cost,
    )(w_mat, patches, bias_col)
    return out[:, :, :Ms]


# -----------------------------------------------------------------------------
# Conv4d forward = im2col (glue) + Pallas GEMM
# -----------------------------------------------------------------------------
def _out_dim(i, p, k, d, s):
    return (i + 2 * p - k - (k - 1) * (d - 1)) // s + 1


def conv4d_pallas(x, w, stride=(1, 1, 1, 1), padding=(0, 0, 0, 0),
                  dilation=(1, 1, 1, 1), bias=None,
                  compute_dtype=jnp.bfloat16):
    """x: (B, Cin, L, D, H, W); w: (Cout, Cin, lk, dk, hk, wk).

    compute_dtype=jnp.float32 is available if the bf16 cast's precision loss
    matters for large C_in * kernel_volume.
    """
    B, C, L, D, H, W = x.shape
    O, Cw, lk, dk, hk, wk = w.shape
    assert Cw == C
    ls, ds_, hs, ws = stride
    lp, dp, hp, wp = padding
    ld, dd, hd, wd = dilation

    lo = _out_dim(L, lp, lk, ld, ls)
    do = _out_dim(D, dp, dk, dd, ds_)
    ho = _out_dim(H, hp, hk, hd, hs)
    wo = _out_dim(W, wp, wk, wd, ws)

    xp = jnp.pad(x, ((0, 0), (0, 0), (lp, lp), (dp, dp),
                     (hp, hp), (wp, wp))).astype(compute_dtype)

    # im2col: one strided slice per kernel offset, stacked on a new axis right
    # after C so K = C*kk is C-major and the weight matrix is just w.reshape
    # (no pre-GEMM transpose, no post-GEMM output transpose).
    # TODO(synk): fuse im2col into the kernel (manual strided DMA over the
    # padded input held in HBM) to avoid materializing the kernel_volume-times
    # inflated patches matrix in HBM.
    cols = []
    for a in range(lk):
        for b in range(dk):
            for c in range(hk):
                for d in range(wk):
                    sl = lax.slice(
                        xp,
                        (0, 0, a * ld, b * dd, c * hd, d * wd),
                        (B, C,
                         a * ld + (lo - 1) * ls + 1,
                         b * dd + (do - 1) * ds_ + 1,
                         c * hd + (ho - 1) * hs + 1,
                         d * wd + (wo - 1) * ws + 1),
                        (1, 1, ls, ds_, hs, ws))
                    cols.append(sl)  # (B, C, lo, do, ho, wo)
    kk = lk * dk * hk * wk
    Ms = lo * do * ho * wo
    K = C * kk

    patches = jnp.stack(cols, axis=2).reshape(B, K, Ms)   # (B, C*kk, Ms)
    w_mat = w.reshape(O, K).astype(compute_dtype)          # same C-major K order

    if bias is None:
        bias_col = jnp.zeros((O, 1), jnp.float32)
    else:
        bias_col = bias.reshape(O, 1).astype(jnp.float32)

    out = _pallas_conv_gemm(w_mat, patches, bias_col)       # (B, O, Ms) f32
    return out.reshape(B, O, lo, do, ho, wo)                # already final layout


# -----------------------------------------------------------------------------
# Pure-JAX reference (direct accumulation, mirrors the PyTorch forward)
# -----------------------------------------------------------------------------
def conv4d_ref(x, w, stride, padding, dilation):
    B, C, L, D, H, W = x.shape
    O, _, lk, dk, hk, wk = w.shape
    ls, ds_, hs, ws = stride
    lp, dp, hp, wp = padding
    ld, dd, hd, wd = dilation
    lo = _out_dim(L, lp, lk, ld, ls)
    do = _out_dim(D, dp, dk, dd, ds_)
    ho = _out_dim(H, hp, hk, hd, hs)
    wo = _out_dim(W, wp, wk, wd, ws)
    xp = jnp.pad(x, ((0, 0), (0, 0), (lp, lp), (dp, dp), (hp, hp), (wp, wp)))
    out = jnp.zeros((B, O, lo, do, ho, wo), jnp.float32)
    for a in range(lk):
        for b in range(dk):
            for c in range(hk):
                for d in range(wk):
                    sl = xp[:, :,
                            a * ld: a * ld + lo * ls: ls,
                            b * dd: b * dd + do * ds_: ds_,
                            c * hd: c * hd + ho * hs: hs,
                            d * wd: d * wd + wo * ws: ws]
                    out = out + jnp.einsum('bcldhw,oc->boldhw',
                                           sl, w[:, :, a, b, c, d])
    return out


# -----------------------------------------------------------------------------
if __name__ == "__main__":
    key = jax.random.PRNGKey(0)
    kx, kw = jax.random.split(key)

    # Small shapes consistent with the module's forward.
    B, C_in, C_out = 2, 4, 8
    L, D, H, W = 4, 4, 6, 6
    kernel_size = (2, 2, 2, 2)
    stride = (1, 1, 2, 1)
    padding = (0, 1, 1, 0)
    dilation = (1, 1, 1, 1)

    x = jax.random.normal(kx, (B, C_in, L, D, H, W), dtype=jnp.float32)

    # Deterministic kaiming_uniform_(a=sqrt(5)) equivalent:
    # U(-1/sqrt(fan_in), 1/sqrt(fan_in)).
    fan_in = C_in * math.prod(kernel_size)
    bound = 1.0 / math.sqrt(fan_in)
    w = jax.random.uniform(kw, (C_out, C_in) + kernel_size,
                           minval=-bound, maxval=bound, dtype=jnp.float32)
    # Module default is bias=False -> bias is None.
    # TODO(synk): groups != 1 is asserted away in the PyTorch module; not implemented here either.

    out = conv4d_pallas(x, w, stride=stride, padding=padding, dilation=dilation)
    out = jax.block_until_ready(out)

    ref = conv4d_ref(x, w, stride, padding, dilation)
    assert out.shape == ref.shape, (out.shape, ref.shape)
    # bf16 inputs with f32 accumulation: tolerance raised accordingly.
    assert jnp.allclose(out, ref, rtol=3e-2, atol=3e-2), \
        float(jnp.max(jnp.abs(out - ref)))

    print("KERNEL_OK")
</pallas_src>

<mosaic_0001>
module attributes {stable_mosaic.version = 11 : i64} {
  func.func @_gemm_kernel(%arg0: i32, %arg1: i32, %arg2: i32, %arg3: memref<8x64xbf16, #tpu.memory_space<vmem>>, %arg4: memref<1x64x384xbf16, #tpu.memory_space<vmem>>, %arg5: memref<8x1xf32, #tpu.memory_space<vmem>>, %arg6: memref<1x8x384xf32, #tpu.memory_space<vmem>>) attributes {dimension_semantics = [#tpu.dimension_semantics<parallel>, #tpu.dimension_semantics<parallel>, #tpu.dimension_semantics<arbitrary>], iteration_bounds = array<i64: 2, 1, 1>, scalar_prefetch = 0 : i64, scratch_operands = 0 : i64, tpu.core_type = #tpu.core_type<tc>, window_params = [{pipeline_mode = #tpu.pipeline_mode<synchronous>, transform_indices = @transform_0, window_bounds = array<i64: 8, 64>}, {transform_indices = @transform_1, window_bounds = array<i64: 1, 64, 384>}, {pipeline_mode = #tpu.pipeline_mode<synchronous>, transform_indices = @transform_2, window_bounds = array<i64: 8, 1>}, {transform_indices = @transform_3, window_bounds = array<i64: 1, 8, 384>}]} {
    %c0_i32 = arith.constant 0 : i32
    %0 = arith.cmpi eq, %arg2, %c0_i32 : i32
    %1 = arith.extui %0 : i1 to i32
    %c0_i32_0 = arith.constant 0 : i32
    %2 = arith.cmpi ne, %1, %c0_i32_0 : i32
    scf.if %2 {
      %cst_13 = arith.constant 0.000000e+00 : f32
      %16 = vector.broadcast %cst_13 : f32 to vector<8x384xf32>
      %c0_14 = arith.constant 0 : index
      %c0_15 = arith.constant 0 : index
      %c0_16 = arith.constant 0 : index
      %17 = vector.load %arg6[%c0_14, %c0_15, %c0_16] : memref<1x8x384xf32, #tpu.memory_space<vmem>>, vector<1x8x384xf32>
      %18 = vector.shape_cast %17 : vector<1x8x384xf32> to vector<8x384xf32>
      %19 = vector.shape_cast %16 : vector<8x384xf32> to vector<1x8x384xf32>
      tpu.vector_store %arg6[%c0_14, %c0_15, %c0_16], %19 {strides = array<i32>} : memref<1x8x384xf32, #tpu.memory_space<vmem>>, vector<1x8x384xf32>,
    } else {
    }
    %c0 = arith.constant 0 : index
    %c0_1 = arith.constant 0 : index
    %3 = vector.load %arg3[%c0, %c0_1] : memref<8x64xbf16, #tpu.memory_space<vmem>>, vector<8x64xbf16>
    %c0_2 = arith.constant 0 : index
    %c0_3 = arith.constant 0 : index
    %c0_4 = arith.constant 0 : index
    %4 = vector.load %arg6[%c0_2, %c0_3, %c0_4] : memref<1x8x384xf32, #tpu.memory_space<vmem>>, vector<1x8x384xf32>
    %5 = vector.shape_cast %4 : vector<1x8x384xf32> to vector<8x384xf32>
    %c0_5 = arith.constant 0 : index
    %c0_6 = arith.constant 0 : index
    %c0_7 = arith.constant 0 : index
    %6 = vector.load %arg4[%c0_5, %c0_6, %c0_7] : memref<1x64x384xbf16, #tpu.memory_space<vmem>>, vector<1x64x384xbf16>
    %7 = vector.shape_cast %6 : vector<1x64x384xbf16> to vector<64x384xbf16>
    %cst = arith.constant dense<0.000000e+00> : vector<8x384xf32>
    %8 = tpu.matmul %3, %7, %cst {dimension_numbers = #tpu.dot_dimension_numbers<[1], [0], [0], [1], [0, 0, 1, 1], [], []>} : vector<8x64xbf16>, vector<64x384xbf16>, vector<8x384xf32> -> vector<8x384xf32>
    %9 = arith.addf %5, %8 : vector<8x384xf32>
    %c0_8 = arith.constant 0 : index
    %c0_9 = arith.constant 0 : index
    %c0_10 = arith.constant 0 : index
    %10 = vector.load %arg6[%c0_8, %c0_9, %c0_10] : memref<1x8x384xf32, #tpu.memory_space<vmem>>, vector<1x8x384xf32>
    %11 = vector.shape_cast %10 : vector<1x8x384xf32> to vector<8x384xf32>
    %12 = vector.shape_cast %9 : vector<8x384xf32> to vector<1x8x384xf32>
    tpu.vector_store %arg6[%c0_8, %c0_9, %c0_10], %12 {strides = array<i32>} : memref<1x8x384xf32, #tpu.memory_space<vmem>>, vector<1x8x384xf32>,
    %c0_i32_11 = arith.constant 0 : i32
    %13 = arith.cmpi eq, %arg2, %c0_i32_11 : i32
    %14 = arith.extui %13 : i1 to i32
    %c0_i32_12 = arith.constant 0 : i32
    %15 = arith.cmpi ne, %14, %c0_i32_12 : i32
    scf.if %15 {
      %c0_13 = arith.constant 0 : index
      %c0_14 = arith.constant 0 : index
      %c0_15 = arith.constant 0 : index
      %16 = vector.load %arg6[%c0_13, %c0_14, %c0_15] : memref<1x8x384xf32, #tpu.memory_space<vmem>>, vector<1x8x384xf32>
      %17 = vector.shape_cast %16 : vector<1x8x384xf32> to vector<8x384xf32>
      %c0_16 = arith.constant 0 : index
      %c0_17 = arith.constant 0 : index
      %18 = vector.load %arg5[%c0_16, %c0_17] : memref<8x1xf32, #tpu.memory_space<vmem>>, vector<8x1xf32>
      %19 = vector.broadcast %18 : vector<8x1xf32> to vector<8x384xf32>
      %20 = arith.addf %17, %19 : vector<8x384xf32>
      %c0_18 = arith.constant 0 : index
      %c0_19 = arith.constant 0 : index
      %c0_20 = arith.constant 0 : index
      %21 = vector.load %arg6[%c0_18, %c0_19, %c0_20] : memref<1x8x384xf32, #tpu.memory_space<vmem>>, vector<1x8x384xf32>
      %22 = vector.shape_cast %21 : vector<1x8x384xf32> to vector<8x384xf32>
      %23 = vector.shape_cast %20 : vector<8x384xf32> to vector<1x8x384xf32>
      tpu.vector_store %arg6[%c0_18, %c0_19, %c0_20], %23 {strides = array<i32>} : memref<1x8x384xf32, #tpu.memory_space<vmem>>, vector<1x8x384xf32>,
    } else {
    }
    return
  }
  func.func @transform_0(%arg0: i32, %arg1: i32, %arg2: i32) -> (i32, i32) {
    %c0_i32 = arith.constant 0 : i32
    %c0_i32_0 = arith.constant 0 : i32
    %c0_i32_1 = arith.constant 0 : i32
    return %c0_i32, %c0_i32_0 : i32, i32
  }
  func.func @transform_1(%arg0: i32, %arg1: i32, %arg2: i32) -> (i32, i32, i32) {
    %c0_i32 = arith.constant 0 : i32
    return %arg0, %arg2, %arg1 : i32, i32, i32
  }
  func.func @transform_2(%arg0: i32, %arg1: i32, %arg2: i32) -> (i32, i32) {
    %c0_i32 = arith.constant 0 : i32
    %c0_i32_0 = arith.constant 0 : i32
    %c0_i32_1 = arith.constant 0 : i32
    return %c0_i32, %c0_i32_0 : i32, i32
  }
  func.func @transform_3(%arg0: i32, %arg1: i32, %arg2: i32) -> (i32, i32, i32) {
    %c0_i32 = arith.constant 0 : i32
    %c0_i32_0 = arith.constant 0 : i32
    return %arg0, %c0_i32, %arg1 : i32, i32, i32
  }
}

</mosaic_0001>

<llo_original>
// kernel: tpu_custom_call.1
$region0: #{tpu_custom_call.1}
  #allocation0 [shape = 'u32[]', space=smem, size = 0x4, offset = 0x4, fixed_abs, tag = 'smem constant byte address 0x4 - core index']
  #allocation1 [shape = 'u32[144,128]{1,0:T(1,128)}', space=vmem, size = 0x12000, scoped, tag = 'internal scratch']
  %s0 = inlined_call_operand.vmem [shape: bf16[8,64], index: 0, kind: input, shape index: {}]
  %s1 = inlined_call_operand.hbm [shape: bf16[2,64,384], index: 1, kind: input, shape index: {}]
  %s2 = inlined_call_operand.vmem [shape: f32[8,1], index: 2, kind: input, shape index: {}]
  %s3 = inlined_call_operand.hbm [shape: f32[2,8,384], index: 3, kind: output, shape index: {}]
  %s4 = sld [smem:[#allocation0]]
  $region57: #{tpu_custom_call.1} parent=0
    _
  %s6 = ssub.s32 1, %s4
  %s7 = scalar_select 0, %s6, %s4
  $region1: #{tpu_custom_call.1} parent=0
    #allocation2 [shape = 'u8[98304]{0}', space=vmem, size = 0x18000, scoped, tag = 'input window, operand 1']
    #allocation3 [shape = 's32[2]{0}', space=sflag, size = 0x8, scoped, tag = 'scoped memory for tpu_custom_call.1']
    #allocation4 [shape = 's32[2]{0}', space=sflag, size = 0x8, scoped, tag = 'scoped memory for tpu_custom_call.1']
    #allocation5 [shape = 'u8[24576]{0}', space=vmem, size = 0x6000, scoped, tag = 'output window, operand 0']
    %8 = vsyncpa [#allocation3], 0
    %s9 = scalar_lea.sflag [#allocation3], 1
    %10 = vsyncpa %s9, 0
    %11 = vsyncpa [#allocation4], 0
    %s12 = scalar_lea.sflag [#allocation4], 1
    %13 = vsyncpa %s12, 0
    loop: start=0, step=1, limit=4
    $region2: #{tpu_custom_call.1} parent=1 // loop_pre_header
      _
    $region3: #{tpu_custom_call.1} parent=1 // loop_header
      %s15 = sphi 0, %s19
      %p16 = scmp.ge.s32.totalorder %s15, 4
      %s22 = sphi 0, %s41
      %s23 = sphi 0, %s37
      %s24 = sphi 0, %s33
      %s25 = sphi 0, %s22
      %s26 = sphi 0, %s23
      %s27 = sphi 0, %s24
      %s28 = sphi 0, %s25
      %s29 = sphi 0, %s26
      %s30 = sphi 0, %s27
      %s42 = sphi 0, %s42
      %s44 = sphi 0, %s42
      %s45 = sphi 0, %s44
      %s59 = sphi 0, %s45
      %s69 = sphi 0, %s71
      %s72 = sphi 0, %s69
      %s73 = sphi 0, %s72
      %s89 = sphi 0, %s73
      %s93 = sphi 0, %s93
      %s95 = sphi 0, %s93
      %s96 = sphi 0, %s95
      %s110 = sphi 0, %s96
      %s118 = sphi 0, %s120
      %s121 = sphi 0, %s118
      %s122 = sphi 0, %s121
      %s138 = sphi 0, %s122
    $region4: #{tpu_custom_call.1} parent=1 // loop_header_branch
      %18 = sbr.rel (%p16) target = $region8
    $region5: #{tpu_custom_call.1} parent=1 // loop_body
      %s20 = ssub.s32 %s15, 1
      %s21 = ssub.s32 %s15, 2
      %s31 = sadd.s32 1, %s24
      %p32 = scmp.ge.s32.totalorder %s31, 1
      %s33 = scalar_select %p32, 0, %s31
      %s34 = sadd.s32 1, %s23
      %s35 = scalar_select %p32, %s34, %s23
      %p36 = scmp.ge.s32.totalorder %s35, 1
      %s37 = scalar_select %p36, 0, %s35
      %s38 = sadd.s32 1, %s22
      %s39 = scalar_select %p36, %s38, %s22
      %p40 = scmp.ge.s32.totalorder %s39, 2
      %s41 = scalar_select %p40, 0, %s39
      %s43 = sadd.s32 %s42, 1
      %p46 = scmp.eq.s32.totalorder %s15, 1
      %p47 = scmp.ne.s32.totalorder %s42, %s44
      %p48 = scmp.eq.s32.totalorder %s15, 0
      %p49 = por %p47, %p48
      %p50 = scmp.ne.s32.totalorder %s42, %s44
      %p51 = scmp.eq.s32.totalorder %s20, 1
      %p52 = por %p50, %p51
      %p53 = scmp.ne.s32.totalorder %s44, %s45
      %p54 = scmp.eq.s32.totalorder %s20, 0
      %p55 = por %p53, %p54
      %p56 = scmp.ne.s32.totalorder %s44, %s45
      %p57 = scmp.eq.s32.totalorder %s21, 1
      %p58 = por %p56, %p57
      %p60 = scmp.ne.s32.totalorder %s45, %s59
      %p61 = scmp.eq.s32.totalorder %s21, 0
      %p62 = por %p60, %p61
      %s63 = ssub.s32 %s22, %s41
      %s64 = ssub.s32 %s24, %s33
      %s65 = sor.u32 %s63, %s64
      %s66 = ssub.s32 %s23, %s37
      %s67 = sor.u32 %s65, %s66
      %p68 = scmp.eq.s32.totalorder %s67, 0
      %s70 = sadd.s32 %s69, 1
      %s71 = scalar_select %p68, %s69, %s70
      %p74 = pneg %p68
      %p75 = scmp.eq.s32.totalorder %s15, 1
      %p76 = por %p74, %p75
      %p77 = scmp.ne.s32.totalorder %s69, %s72
      %p78 = scmp.eq.s32.totalorder %s15, 0
      %p79 = por %p77, %p78
      %p80 = scmp.ne.s32.totalorder %s69, %s72
      %p81 = scmp.eq.s32.totalorder %s20, 1
      %p82 = por %p80, %p81
      %p83 = scmp.ne.s32.totalorder %s72, %s73
      %p84 = scmp.eq.s32.totalorder %s20, 0
      %p85 = por %p83, %p84
      %p86 = scmp.ne.s32.totalorder %s72, %s73
      %p87 = scmp.eq.s32.totalorder %s21, 1
      %p88 = por %p86, %p87
      %p90 = scmp.ne.s32.totalorder %s73, %s89
      %p91 = scmp.eq.s32.totalorder %s21, 0
      %p92 = por %p90, %p91
      %s94 = sadd.s32 %s93, 1
      %p97 = scmp.eq.s32.totalorder %s15, 1
      %p98 = scmp.ne.s32.totalorder %s93, %s95
      %p99 = scmp.eq.s32.totalorder %s15, 0
      %p100 = por %p98, %p99
      %p101 = scmp.ne.s32.totalorder %s93, %s95
      %p102 = scmp.eq.s32.totalorder %s20, 1
      %p103 = por %p101, %p102
      %p104 = scmp.ne.s32.totalorder %s95, %s96
      %p105 = scmp.eq.s32.totalorder %s20, 0
      %p106 = por %p104, %p105
      %p107 = scmp.ne.s32.totalorder %s95, %s96
      %p108 = scmp.eq.s32.totalorder %s21, 1
      %p109 = por %p107, %p108
      %p111 = scmp.ne.s32.totalorder %s96, %s110
      %p112 = scmp.eq.s32.totalorder %s21, 0
      %p113 = por %p111, %p112
      %s114 = ssub.s32 %s22, %s41
      %s115 = ssub.s32 %s23, %s37
      %s116 = sor.u32 %s114, %s115
      %p117 = scmp.eq.s32.totalorder %s116, 0
      %s119 = sadd.s32 %s118, 1
      %s120 = scalar_select %p117, %s118, %s119
      %p123 = pneg %p117
      %p124 = scmp.eq.s32.totalorder %s15, 1
      %p125 = por %p123, %p124
      %p126 = scmp.ne.s32.totalorder %s118, %s121
      %p127 = scmp.eq.s32.totalorder %s15, 0
      %p128 = por %p126, %p127
      %p129 = scmp.ne.s32.totalorder %s118, %s121
      %p130 = scmp.eq.s32.totalorder %s20, 1
      %p131 = por %p129, %p130
      %p132 = scmp.ne.s32.totalorder %s121, %s122
      %p133 = scmp.eq.s32.totalorder %s20, 0
      %p134 = por %p132, %p133
      %p135 = scmp.ne.s32.totalorder %s121, %s122
      %p136 = scmp.eq.s32.totalorder %s21, 1
      %p137 = por %p135, %p136
      %p139 = scmp.ne.s32.totalorder %s122, %s138
      %p140 = scmp.eq.s32.totalorder %s21, 0
      %p141 = por %p139, %p140
      %p142 = scmp.le.s32.totalorder 1, %s15
      %p143 = scmp.lt.s32.totalorder %s15, 3
      %p144 = pnand %p142, %p143
      %p145 = pneg %p144
      // Predicated region
      $region9: #{tpu_custom_call.1} parent=5 // pred_check
        _
      $region10: #{tpu_custom_call.1} parent=5 // pred_check_branch
        %147 = sbr.rel (%p144) target = $region12
      $region11: #{tpu_custom_call.1} parent=5 // pred_region
        %s148 = ssub.s32 %s15, 1
        // Predicated region
        $region13: #{tpu_custom_call.1} parent=11 // pred_check
          %p149 = pneg %p55
        $region14: #{tpu_custom_call.1} parent=11 // pred_check_branch
          %151 = sbr.rel (%p149) target = $region16
        $region15: #{tpu_custom_call.1} parent=11 // pred_region
          _
        $region16: #{tpu_custom_call.1} parent=11 // pred_fallthru
          _
        // Predicated region
        $region17: #{tpu_custom_call.1} parent=11 // pred_check
          %p152 = pneg %p106
        $region18: #{tpu_custom_call.1} parent=11 // pred_check_branch
          %154 = sbr.rel (%p152) target = $region20
        $region19: #{tpu_custom_call.1} parent=11 // pred_region
          _
        $region20: #{tpu_custom_call.1} parent=11 // pred_fallthru
          _
      $region12: #{tpu_custom_call.1} parent=5 // pred_fallthru
        _
      %p155 = scmp.lt.s32.totalorder %s15, 2
      // Predicated region
      $region21: #{tpu_custom_call.1} parent=5 // pred_check
        %p156 = pneg %p155
      $region22: #{tpu_custom_call.1} parent=5 // pred_check_branch
        %158 = sbr.rel (%p156) target = $region24
      $region23: #{tpu_custom_call.1} parent=5 // pred_region
        // Predicated region
        $region25: #{tpu_custom_call.1} parent=23 // pred_check
          %p159 = pneg %p79
        $region26: #{tpu_custom_call.1} parent=23 // pred_check_branch
          %161 = sbr.rel (%p159) target = $region28
        $region27: #{tpu_custom_call.1} parent=23 // pred_region
          %s162 = sand.u32 %s69, 1
          %s163 = scalar_lea.sflag [#allocation3], %s162
          %s164 = sand.u32 %s69, 1
          %s165 = smul.addr %s164, 96
          %s166 = scalar_lea.vmem [#allocation2], %s165
          %s167 = smul.u32 8, %s24
          %s168 = smul.u32 3, %s23
          %s170 = ssub.s32 1536, 1536
          %171 = vsyncadd %s163, %s170
          %s172 = smul.addr %s167, 3
          %s173 = sadd.s32 %s168, %s172
          %s174 = smul.addr %s22, 24
          %s175 = sadd.s32 %s173, %s174
          %s176 = smul.addr %s175, 64
          %s177 = scalar_lea.hbm %s1, %s176
          %s178 = sshll.u32 %s166, 4
          %s179 = int_to_ptr.vmem [resolvable:$true] %s178
          %184 = dma.hbm_to_vmem [thread:$0]  %s177, 1536, %s179, %s163, 192, 192, 12
        $region28: #{tpu_custom_call.1} parent=23 // pred_fallthru
          _
      $region24: #{tpu_custom_call.1} parent=5 // pred_fallthru
        _
      %p185 = scmp.le.s32.totalorder 1, %s15
      %p186 = scmp.lt.s32.totalorder %s15, 3
      %p187 = pnand %p185, %p186
      %p188 = pneg %p187
      // Predicated region
      $region29: #{tpu_custom_call.1} parent=5 // pred_check
        _
      $region30: #{tpu_custom_call.1} parent=5 // pred_check_branch
        %190 = sbr.rel (%p187) target = $region32
      $region31: #{tpu_custom_call.1} parent=5 // pred_region
        %s191 = ssub.s32 %s15, 1
        %s192 = sand.u32 %s72, 1
        %s193 = scalar_lea.sflag [#allocation3], %s192
        %s194 = sand.u32 %s72, 1
        %s195 = smul.addr %s194, 96
        %s196 = scalar_lea.vmem [#allocation2], %s195
        // Predicated region
        $region33: #{tpu_custom_call.1} parent=31 // pred_check
          %p197 = pneg %p85
        $region34: #{tpu_custom_call.1} parent=31 // pred_check_branch
          %199 = sbr.rel (%p197) target = $region36
        $region35: #{tpu_custom_call.1} parent=31 // pred_region
          %200 = dma.done %s193, 1536
        $region36: #{tpu_custom_call.1} parent=31 // pred_fallthru
          _
        %p201 = pneg %p55
        %p202 = pneg %p52
        %s203 = sand.u32 %s72, 1
        %s204 = scalar_lea.sflag [#allocation3], %s203
        %s205 = sand.u32 %s72, 1
        %s206 = smul.addr %s205, 96
        %s207 = scalar_lea.vmem [#allocation2], %s206
        %p208 = pneg %p85
        %p209 = pneg %p82
        %p210 = pneg %p106
        %p211 = pneg %p103
        %p212 = pneg %p134
        %p213 = pneg %p131
        %s214 = sand.u32 %s121, 1
        %s215 = scalar_lea.sflag [#allocation4], %s214
        %s216 = sand.u32 %s121, 1
        %s217 = smul.addr %s216, 24
        %s218 = scalar_lea.vmem [#allocation5], %s217
        %s219 = smul.u32 8, %s27
        %s220 = smul.u32 3, %s26
        %s221 = smul.u32 3, %s26
        %p223 = scmp.eq.s32.totalorder %s27, 0
        // Predicated region
        $region37: #{tpu_custom_call.1} parent=31 // pred_check
          %p224 = pneg %p223
        $region38: #{tpu_custom_call.1} parent=31 // pred_check_branch
          %226 = sbr.rel (%p224) target = $region40
        $region39: #{tpu_custom_call.1} parent=31 // pred_region
          %227 = vst [vmem:[%s218] sm:$0xff] 0.0
          %228 = vst [vmem:[%s218 + $0x8] sm:$0xff] 0.0
          %229 = vst [vmem:[%s218 + $0x10] sm:$0xff] 0.0
        $region40: #{tpu_custom_call.1} parent=31 // pred_fallthru
          _
        %v230 = vld [vmem:[%s0] sm:$0xf]
        %v231 = vld [vmem:[%s218] sm:$0xff]
        %v232 = vld [vmem:[%s218 + $0x8] sm:$0xff]
        %v233 = vld [vmem:[%s218 + $0x10] sm:$0xff]
        %v234 = vld [vmem:[%s196] sm:$0xff]
        %v235 = vld [vmem:[%s196 + $0x8] sm:$0xf]
        %v236 = vld [vmem:[%s196 + $0xc] sm:$0xff]
        %v237 = vld [vmem:[%s196 + $0x14] sm:$0xf]
        %v238 = vld [vmem:[%s196 + $0x18] sm:$0xff]
        %v239 = vld [vmem:[%s196 + $0x20] sm:$0xf]
        %v240 = vld [vmem:[%s196 + $0x24] sm:$0xff]
        %v241 = vld [vmem:[%s196 + $0x2c] sm:$0xf]
        %v242 = vld [vmem:[%s196 + $0x30] sm:$0xff]
        %v243 = vld [vmem:[%s196 + $0x38] sm:$0xf]
        %v244 = vld [vmem:[%s196 + $0x3c] sm:$0xff]
        %v245 = vld [vmem:[%s196 + $0x44] sm:$0xf]
        %v246 = vld [vmem:[%s196 + $0x48] sm:$0xff]
        %v247 = vld [vmem:[%s196 + $0x50] sm:$0xf]
        %v248 = vld [vmem:[%s196 + $0x54] sm:$0xff]
        %v249 = vld [vmem:[%s196 + $0x5c] sm:$0xf]
        %v266 = vunpack.c.l.b16 %v234
        %v267 = vunpack.c.h.b16 %v234
        %v268 = vunpack.c.l.b16 %v235
        %v269 = vunpack.c.l.b16 %v236
        %v270 = vunpack.c.h.b16 %v236
        %v271 = vunpack.c.l.b16 %v237
        %v272 = vunpack.c.l.b16 %v238
        %v273 = vunpack.c.h.b16 %v238
        %v274 = vunpack.c.l.b16 %v239
        %v275 = vunpack.c.l.b16 %v240
        %v276 = vunpack.c.h.b16 %v240
        %v277 = vunpack.c.l.b16 %v241
        %v278 = vunpack.c.l.b16 %v242
        %v279 = vunpack.c.h.b16 %v242
        %v280 = vunpack.c.l.b16 %v243
        %v281 = vunpack.c.l.b16 %v244
        %v282 = vunpack.c.h.b16 %v244
        %v283 = vunpack.c.l.b16 %v245
        %v284 = vunpack.c.l.b16 %v246
        %v285 = vunpack.c.h.b16 %v246
        %v286 = vunpack.c.l.b16 %v247
        %v287 = vunpack.c.l.b16 %v248
        %v288 = vunpack.c.h.b16 %v248
        %v289 = vunpack.c.l.b16 %v249
        %v290 = vpack.c.b16 %v269, %v266
        %v291 = vpack.c.b16 %v270, %v267
        %v292 = vpack.c.b16 %v271, %v268
        %v293 = vpack.c.b16 %v275, %v272
        %v294 = vpack.c.b16 %v276, %v273
        %v295 = vpack.c.b16 %v277, %v274
        %v296 = vpack.c.b16 %v281, %v278
        %v297 = vpack.c.b16 %v282, %v279
        %v298 = vpack.c.b16 %v283, %v280
        %v299 = vpack.c.b16 %v287, %v284
        %v300 = vpack.c.b16 %v288, %v285
        %v301 = vpack.c.b16 %v289, %v286
        %vm314 = vcmask 523264
        %v316 = vsel %vm314, %v230, 0
        %318 = vmatprep.subr.bf16.mxu0 %v291
        %319 = vmatpush1.bf16.msra.mxu0 %v290
        %320 = vmatprep.subr.bf16.mxu0 %v294
        %321 = vmatpush1.bf16.msra.mxu0 %v293
        %322 = vmatprep.subr.bf16.mxu0 %v297
        %323 = vmatpush1.bf16.msra.mxu0 %v296
        %324 = vmatprep.subr.bf16.mxu0 %v300
        %325 = vmatpush1.bf16.msra.mxu0 %v299
        %326 = vmatprep.subr.bf16.mxu0 0
        %327 = vmatpush1.bf16.msra.mxu0 0
        %328 = vmatprep.subr.bf16.mxu0 0
        %329 = vmatpush1.bf16.msra.mxu0 0
        %330 = vmatprep.subr.bf16.mxu0 0
        %331 = vmatpush1.bf16.msra.mxu0 0
        %332 = vmatprep.subr.bf16.mxu0 0
        %333 = vmatpush1.bf16.msra.mxu0 0
        %334 = vmatprep.subr.bf16.mxu0 0
        %335 = vmatpush1.bf16.msra.mxu0 0
        %336 = vmatprep.subr.bf16.mxu0 0
        %337 = vmatpush1.bf16.msra.mxu0 0
        %338 = vmatprep.subr.bf16.mxu0 0
        %339 = vmatpush1.bf16.msra.mxu0 0
        %340 = vmatprep.subr.bf16.mxu0 0
        %341 = vmatpush1.bf16.msra.mxu0 0
        %342 = vmatprep.subr.bf16.mxu0 0
        %343 = vmatpush1.bf16.msra.mxu0 0
        %344 = vmatprep.subr.bf16.mxu0 0
        %345 = vmatpush1.bf16.msra.mxu0 0
        %346 = vmatprep.subr.bf16.mxu0 0
        %347 = vmatpush1.bf16.msra.mxu0 0
        %348 = vmatprep.subr.bf16.mxu0 0
        %349 = vmatpush1.bf16.msra.mxu0 0
        %350 = vmatprep.mubr.bf16.mxu0 0
        %351 = vmatmul.mubr.bf16.gmra.mrb[0].mxu0 %v316
        %v352 = vpop.f32.mrb[0].mxu0
        %v353 = vadd.f32 0.0, %v352
        %v354 = vpop.f32.mrb[0].mxu0
        %v355 = vadd.f32 0.0, %v354
        %v356 = vpop.f32.mrb[0].mxu0
        %v357 = vpop.f32.mrb[0].mxu0
        %358 = vdwg.mxu0
        %359 = vmatprep.subr.bf16.mxu0 0
        %360 = vmatpush1.bf16.msra.mxu0 %v292
        %361 = vmatprep.subr.bf16.mxu0 0
        %362 = vmatpush1.bf16.msra.mxu0 %v295
        %363 = vmatprep.subr.bf16.mxu0 0
        %364 = vmatpush1.bf16.msra.mxu0 %v298
        %365 = vmatprep.subr.bf16.mxu0 0
        %366 = vmatpush1.bf16.msra.mxu0 %v301
        %367 = vmatprep.subr.bf16.mxu0 0
        %368 = vmatpush1.bf16.msra.mxu0 0
        %369 = vmatprep.subr.bf16.mxu0 0
        %370 = vmatpush1.bf16.msra.mxu0 0
        %371 = vmatprep.subr.bf16.mxu0 0
        %372 = vmatpush1.bf16.msra.mxu0 0
        %373 = vmatprep.subr.bf16.mxu0 0
        %374 = vmatpush1.bf16.msra.mxu0 0
        %375 = vmatprep.subr.bf16.mxu0 0
        %376 = vmatpush1.bf16.msra.mxu0 0
        %377 = vmatprep.subr.bf16.mxu0 0
        %378 = vmatpush1.bf16.msra.mxu0 0
        %379 = vmatprep.subr.bf16.mxu0 0
        %380 = vmatpush1.bf16.msra.mxu0 0
        %381 = vmatprep.subr.bf16.mxu0 0
        %382 = vmatpush1.bf16.msra.mxu0 0
        %383 = vmatprep.subr.bf16.mxu0 0
        %384 = vmatpush1.bf16.msra.mxu0 0
        %385 = vmatprep.subr.bf16.mxu0 0
        %386 = vmatpush1.bf16.msra.mxu0 0
        %387 = vmatprep.subr.bf16.mxu0 0
        %388 = vmatpush1.bf16.msra.mxu0 0
        %389 = vmatprep.subr.bf16.mxu0 0
        %390 = vmatpush1.bf16.msra.mxu0 0
        %391 = vmatprep.mubr.bf16.mxu0 0
        %392 = vmatmul.mubr.bf16.gmra.mrb[0].mxu0 %v316
        %v393 = vpop.f32.mrb[0].mxu0
        %v394 = vadd.f32 0.0, %v393
        %v395 = vpop.f32.mrb[0].mxu0
        %v396 = vpop.f32.mrb[0].mxu0
        %v397 = vpop.f32.mrb[0].mxu0
        %398 = vdwg.mxu0
        %v399 = vadd.f32 %v231, %v353
        %v400 = vadd.f32 %v232, %v355
        %v401 = vadd.f32 %v233, %v394
        %402 = vst [vmem:[%s218] sm:$0xff] %v399
        %403 = vst [vmem:[%s218 + $0x8] sm:$0xff] %v400
        %404 = vst [vmem:[%s218 + $0x10] sm:$0xff] %v401
        // Predicated region
        $region41: #{tpu_custom_call.1} parent=31 // pred_check
          %p405 = pneg %p223
        $region42: #{tpu_custom_call.1} parent=31 // pred_check_branch
          %407 = sbr.rel (%p405) target = $region44
        $region43: #{tpu_custom_call.1} parent=31 // pred_region
          %v408 = vld [vmem:[%s218] sm:$0xff]
          %v409 = vld [vmem:[%s218 + $0x8] sm:$0xff]
          %v410 = vld [vmem:[%s218 + $0x10] sm:$0xff]
          %v411 = vld [vmem:[%s2] sm:$0xff]
          %413 = vset.pattern.permute.xlu0 0
          %414 = vperm.xlu0 %413, %v411
          %v415 = vpop.permute.xlu0 %414
          %v417 = vadd.f32 %v408, %v415
          %v418 = vadd.f32 %v409, %v415
          %v419 = vadd.f32 %v410, %v415
          %420 = vst [vmem:[%s218] sm:$0xff] %v417
          %421 = vst [vmem:[%s218 + $0x8] sm:$0xff] %v418
          %422 = vst [vmem:[%s218 + $0x10] sm:$0xff] %v419
        $region44: #{tpu_custom_call.1} parent=31 // pred_fallthru
          _
        %s423 = sand.u32 %s121, 1
        %s424 = scalar_lea.sflag [#allocation4], %s423
        %s425 = sand.u32 %s121, 1
        %s426 = smul.addr %s425, 24
        %s427 = scalar_lea.vmem [#allocation5], %s426
        // Predicated region
        $region45: #{tpu_custom_call.1} parent=31 // pred_check
          %p428 = pneg %p131
        $region46: #{tpu_custom_call.1} parent=31 // pred_check_branch
          %430 = sbr.rel (%p428) target = $region48
        $region47: #{tpu_custom_call.1} parent=31 // pred_region
          %s431 = smul.u32 3, %s26
          %s433 = ssub.s32 384, 384
          %434 = vsyncadd %s424, %s433
          %s435 = smul.addr %s25, 3
          %s436 = sadd.s32 %s431, %s435
          %s437 = smul.addr %s436, 128
          %s438 = scalar_lea.hbm %s3, %s437
          %s440 = sshll.u32 %s427, 4
          %s441 = int_to_ptr.vmem [resolvable:$true] %s440
          %443 = dma.vmem_to_hbm [thread:$0]  %s441, 384, %s438, %s424
        $region48: #{tpu_custom_call.1} parent=31 // pred_fallthru
          _
      $region32: #{tpu_custom_call.1} parent=5 // pred_fallthru
        _
      %p444 = scmp.le.s32.totalorder 2, %s15
      // Predicated region
      $region49: #{tpu_custom_call.1} parent=5 // pred_check
        %p445 = pneg %p444
      $region50: #{tpu_custom_call.1} parent=5 // pred_check_branch
        %447 = sbr.rel (%p445) target = $region52
      $region51: #{tpu_custom_call.1} parent=5 // pred_region
        %s448 = ssub.s32 %s15, 2
        // Predicated region
        $region53: #{tpu_custom_call.1} parent=51 // pred_check
          %p449 = pneg %p137
        $region54: #{tpu_custom_call.1} parent=51 // pred_check_branch
          %451 = sbr.rel (%p449) target = $region56
        $region55: #{tpu_custom_call.1} parent=51 // pred_region
          %s452 = sand.u32 %s122, 1
          %s453 = scalar_lea.sflag [#allocation4], %s452
          %s454 = sand.u32 %s122, 1
          %s455 = smul.addr %s454, 24
          %s456 = scalar_lea.vmem [#allocation5], %s455
          %457 = dma.done %s453, 384
        $region56: #{tpu_custom_call.1} parent=51 // pred_fallthru
          _
      $region52: #{tpu_custom_call.1} parent=5 // pred_fallthru
        _
    $region6: #{tpu_custom_call.1} parent=1 // loop_footer
      %s19 = sadd.s32 1, %s15
    $region7: #{tpu_custom_call.1} parent=1 // loop_footer_branch
      %14 = sbr.rel target = $region3
    $region8: #{tpu_custom_call.1} parent=1 // loop_exit
      _
    %458 = vsyncpa [#allocation3], 1
    %s459 = scalar_lea.sflag [#allocation3], 1
    %460 = vsyncpa %s459, 1
    %461 = vsyncpa [#allocation4], 1
    %s462 = scalar_lea.sflag [#allocation4], 1
    %463 = vsyncpa %s462, 1

</llo_original>
